<compile_context>
chip_gen: v6e
topology: v6e:2x2x1
jax: 0.10.0
libtpu: 0.0.40
codegen_flags: <defaults>
</compile_context>

<pallas_src>
import functools

import jax
import jax.numpy as jnp
from jax import lax
from jax.experimental import pallas as pl
from jax.experimental.pallas import tpu as pltpu

_SQRT_HALF = 0.7071067811865476


def _round_up(x, m):
    return ((x + m - 1) // m) * m


def _gelu_exact(x):
    # Matches torch.nn.GELU() default (erf-based, exact); computed in f32.
    return 0.5 * x * (1.0 + lax.erf(x * _SQRT_HALF))


def _apply_activation(x, activation):
    if activation in (None, "linear"):
        return x
    if activation == "gelu":
        return _gelu_exact(x)
    if activation == "gelu_tanh":
        # tanh-approx GELU: tanh goes to the EUP slot, far cheaper than the
        # erf VALU polynomial.  Slightly deviates from torch's exact GELU, so
        # it is opt-in only.
        c = 0.7978845608028654
        return 0.5 * x * (1.0 + jnp.tanh(c * (x + 0.044715 * x * x * x)))
    if activation == "relu":
        return jnp.maximum(x, 0.0)
    if activation == "tanh":
        return jnp.tanh(x)
    raise ValueError("Unsupported activation: %s" % activation)


def _make_kernel(activation, cast_to_bf16):
    def kernel(x_ref, w_ref, b_ref, o_ref):
        # x_ref: (tm, H)   w_ref: (H, tn)   b_ref: (1, tn)   o_ref: (tm, tn)
        x = x_ref[...]
        w = w_ref[...]
        if cast_to_bf16:
            # Optional (off by default): recovers full MXU rate for f32
            # models on v5e/v6e at the cost of bf16 operand precision.
            x = x.astype(jnp.bfloat16)
            w = w.astype(jnp.bfloat16)
        acc = jnp.dot(x, w, preferred_element_type=jnp.float32)  # MXU, native K,N
        acc = acc + b_ref[...].astype(jnp.float32)
        o_ref[...] = _apply_activation(acc, activation).astype(o_ref.dtype)

    return kernel


def _physical_vmem_bytes():
    """Best-effort per-core VMEM capacity; conservative 64 MiB fallback."""
    try:
        info = pltpu.get_tpu_info()
    except Exception:
        return 64 << 20
    for name in ("vmem_capacity_bytes", "vmem_size_bytes", "vmem_bytes"):
        v = getattr(info, name, None)
        if v:
            try:
                return int(v)
            except (TypeError, ValueError):
                pass
    return 64 << 20


@functools.partial(
    jax.jit,
    static_argnames=("tm", "tn", "activation", "cast_operands_to_bf16"),
)
def intermediate_forward(hidden_states, weight, bias, *, tm=256, tn=1024,
                         activation="gelu", cast_operands_to_bf16=False):
    """hidden_states: [S, B, H]; weight: [I, H] (nn.Linear layout); bias: [I]."""
    S, B, H = hidden_states.shape
    I = weight.shape[0]
    M = S * B
    out_dtype = hidden_states.dtype

    x_item = jnp.dtype(hidden_states.dtype).itemsize
    w_item = jnp.dtype(weight.dtype).itemsize
    out_item = jnp.dtype(out_dtype).itemsize

    x2d = hidden_states.reshape(M, H)
    # One-time transpose to [H, I]: MXU-native orientation, lane-dense weight
    # tile on the N axis.  Negligible vs. the streamed activation traffic.
    w_t = weight.T
    b2d = bias.reshape(1, I)

    # --- tile sizing (quantum from the INPUT dtype's packing) ---
    sub = {4: 8, 2: 16, 1: 32}.get(x_item, 8)
    tm_eff = min(_round_up(tm, sub), _round_up(M, sub))
    if I <= tn:
        tn_eff = I                       # full-dim block (exempt from 128 rule)
    else:
        tn_eff = _round_up(tn, 128)      # lane-dense, unmasked stores

    # Generation-aware VMEM budget; shrink tiles until the double-buffered
    # working set fits (prefer keeping tn large: arithmetic intensity ~ tn).
    budget = int(_physical_vmem_bytes() * 0.85)

    def vmem_need(tm_e, tn_e):
        tile = (tm_e * H * x_item        # streamed x tile
                + H * tn_e * w_item      # weight tile
                + tn_e * 4               # bias tile
                + tm_e * tn_e * out_item)  # output tile
        return 2 * tile + tm_e * tn_e * 4 + (2 << 20)  # dbl-buf + f32 epilogue

    for _ in range(32):
        if vmem_need(tm_eff, tn_eff) <= budget:
            break
        if tm_eff > 128 and (tm_eff // 2) % sub == 0:
            tm_eff //= 2
        elif tn_eff > 512 and tn_eff % 256 == 0:
            tn_eff //= 2
        elif tm_eff > sub and (tm_eff // 2) % sub == 0:
            tm_eff //= 2
        elif tn_eff > 128 and tn_eff % 256 == 0:
            tn_eff //= 2
        else:
            break

    grid_m = pl.cdiv(M, tm_eff)
    grid_n = pl.cdiv(I, tn_eff)

    # --- grid ordering: minimize re-streamed HBM bytes ---------------------
    # W-resident (N outer, M inner): x re-read grid_n times, W read once.
    # X-resident (M outer, N inner): W re-read grid_m times, x read once.
    x_bytes = M * H * x_item
    w_bytes = I * H * w_item
    w_resident_traffic = x_bytes * grid_n + w_bytes
    x_resident_traffic = w_bytes * grid_m + x_bytes

    if w_resident_traffic <= x_resident_traffic:
        grid = (grid_n, grid_m)
        x_spec = pl.BlockSpec((tm_eff, H), lambda j, i: (i, 0))
        w_spec = pl.BlockSpec((H, tn_eff), lambda j, i: (0, j))
        b_spec = pl.BlockSpec((1, tn_eff), lambda j, i: (0, j))
        o_spec = pl.BlockSpec((tm_eff, tn_eff), lambda j, i: (i, j))
        streamed = w_resident_traffic
    else:
        grid = (grid_m, grid_n)
        x_spec = pl.BlockSpec((tm_eff, H), lambda i, j: (i, 0))
        w_spec = pl.BlockSpec((H, tn_eff), lambda i, j: (0, j))
        b_spec = pl.BlockSpec((1, tn_eff), lambda i, j: (0, j))
        o_spec = pl.BlockSpec((tm_eff, tn_eff), lambda i, j: (i, j))
        streamed = x_resident_traffic

    vmem_limit = int(min(max(vmem_need(tm_eff, tn_eff), 32 << 20), budget))

    has_transcendental = activation in ("gelu", "gelu_tanh", "tanh")
    cost = pl.CostEstimate(
        flops=2 * M * H * I,
        transcendentals=(M * I) if has_transcendental else 0,
        bytes_accessed=streamed + I * 4 + M * I * out_item,
    )

    out2d = pl.pallas_call(
        _make_kernel(activation, cast_operands_to_bf16),
        out_shape=jax.ShapeDtypeStruct((M, I), out_dtype),
        grid_spec=pltpu.PrefetchScalarGridSpec(
            num_scalar_prefetch=0,
            grid=grid,
            in_specs=[x_spec, w_spec, b_spec],
            out_specs=o_spec,
        ),
        compiler_params=pltpu.CompilerParams(
            dimension_semantics=("parallel", "parallel"),
            vmem_limit_bytes=vmem_limit,
        ),
        cost_estimate=cost,
    )(x2d, w_t, b2d)

    return out2d.reshape(S, B, I)


if __name__ == "__main__":
    # config: hidden_size=32, intermediate_size=64, hidden_act='gelu'
    src_len, batch, hidden, intermediate = 8, 2, 32, 64

    key = jax.random.PRNGKey(0)
    k_x, k_w, k_b = jax.random.split(key, 3)
    x = jax.random.normal(k_x, (src_len, batch, hidden), dtype=jnp.float32)
    # Deterministic synthetic parameters with nn.Linear(H, I) shapes.
    weight = jax.random.normal(k_w, (intermediate, hidden), dtype=jnp.float32) * 0.02
    bias = jax.random.normal(k_b, (intermediate,), dtype=jnp.float32) * 0.02

    out = intermediate_forward(x, weight, bias)
    out = jax.block_until_ready(out)

    # Reference in plain JAX (erf-based GELU, matches torch.nn.GELU()).
    ref = _gelu_exact(jnp.einsum("sbh,ih->sbi", x, weight) + bias)
    assert out.shape == (src_len, batch, intermediate)
    assert jnp.allclose(out, ref, atol=1e-5, rtol=1e-5)

    print("KERNEL_OK")
</pallas_src>

<mosaic_0001>
module attributes {stable_mosaic.version = 11 : i64} {
  func.func @kernel(%arg0: i32, %arg1: i32, %arg2: memref<16x32xf32, #tpu.memory_space<vmem>>, %arg3: memref<32x64xf32, #tpu.memory_space<vmem>>, %arg4: memref<1x64xf32, #tpu.memory_space<vmem>>, %arg5: memref<16x64xf32, #tpu.memory_space<vmem>>) attributes {dimension_semantics = [#tpu.dimension_semantics<parallel>, #tpu.dimension_semantics<parallel>], iteration_bounds = array<i64: 1, 1>, scalar_prefetch = 0 : i64, scratch_operands = 0 : i64, tpu.core_type = #tpu.core_type<tc>, window_params = [{transform_indices = @transform_0, window_bounds = array<i64: 16, 32>}, {transform_indices = @transform_1, window_bounds = array<i64: 32, 64>}, {transform_indices = @transform_2, window_bounds = array<i64: 1, 64>}, {transform_indices = @transform_3, window_bounds = array<i64: 16, 64>}]} {
    %c0 = arith.constant 0 : index
    %c0_0 = arith.constant 0 : index
    %0 = vector.load %arg2[%c0, %c0_0] : memref<16x32xf32, #tpu.memory_space<vmem>>, vector<16x32xf32>
    %c0_1 = arith.constant 0 : index
    %c0_2 = arith.constant 0 : index
    %1 = vector.load %arg3[%c0_1, %c0_2] : memref<32x64xf32, #tpu.memory_space<vmem>>, vector<32x64xf32>
    %cst = arith.constant dense<0.000000e+00> : vector<16x64xf32>
    %2 = tpu.matmul %0, %1, %cst {dimension_numbers = #tpu.dot_dimension_numbers<[1], [0], [0], [1], [0, 0, 1, 1], [], []>} : vector<16x32xf32>, vector<32x64xf32>, vector<16x64xf32> -> vector<16x64xf32>
    %c0_3 = arith.constant 0 : index
    %c0_4 = arith.constant 0 : index
    %3 = vector.load %arg4[%c0_3, %c0_4] : memref<1x64xf32, #tpu.memory_space<vmem>>, vector<1x64xf32>
    %4 = vector.broadcast %3 : vector<1x64xf32> to vector<16x64xf32>
    %5 = arith.addf %2, %4 : vector<16x64xf32>
    %cst_5 = arith.constant 5.000000e-01 : f32
    %6 = vector.broadcast %cst_5 : f32 to vector<16x64xf32>
    %7 = arith.mulf %6, %5 : vector<16x64xf32>
    %cst_6 = arith.constant 0.707106769 : f32
    %8 = vector.broadcast %cst_6 : f32 to vector<16x64xf32>
    %9 = arith.mulf %5, %8 : vector<16x64xf32>
    %10 = math.erf %9 : vector<16x64xf32>
    %cst_7 = arith.constant 1.000000e+00 : f32
    %11 = vector.broadcast %cst_7 : f32 to vector<16x64xf32>
    %12 = arith.addf %11, %10 : vector<16x64xf32>
    %13 = arith.mulf %7, %12 : vector<16x64xf32>
    %c0_8 = arith.constant 0 : index
    %c0_9 = arith.constant 0 : index
    %14 = vector.load %arg5[%c0_8, %c0_9] : memref<16x64xf32, #tpu.memory_space<vmem>>, vector<16x64xf32>
    tpu.vector_store %arg5[%c0_8, %c0_9], %13 {strides = array<i32>} : memref<16x64xf32, #tpu.memory_space<vmem>>, vector<16x64xf32>,
    return
  }
  func.func @transform_0(%arg0: i32, %arg1: i32) -> (i32, i32) {
    %c0_i32 = arith.constant 0 : i32
    %c0_i32_0 = arith.constant 0 : i32
    return %arg1, %c0_i32 : i32, i32
  }
  func.func @transform_1(%arg0: i32, %arg1: i32) -> (i32, i32) {
    %c0_i32 = arith.constant 0 : i32
    %c0_i32_0 = arith.constant 0 : i32
    return %c0_i32, %arg0 : i32, i32
  }
  func.func @transform_2(%arg0: i32, %arg1: i32) -> (i32, i32) {
    %c0_i32 = arith.constant 0 : i32
    %c0_i32_0 = arith.constant 0 : i32
    return %c0_i32, %arg0 : i32, i32
  }
  func.func @transform_3(%arg0: i32, %arg1: i32) -> (i32, i32) {
    %c0_i32 = arith.constant 0 : i32
    return %arg1, %arg0 : i32, i32
  }
}

</mosaic_0001>

<llo_original>
// kernel: intermediate_forward.1
$region0: #{intermediate_forward.1}
  #allocation0 [shape = 'u32[]', space=smem, size = 0x4, offset = 0x4, fixed_abs, tag = 'smem constant byte address 0x4 - core index']
  #allocation1 [shape = 'u32[144,128]{1,0:T(1,128)}', space=vmem, size = 0x12000, scoped, tag = 'internal scratch']
  %s0 = inlined_call_operand.hbm [shape: f32[16,32], index: 0, kind: input, shape index: {}]
  %s1 = inlined_call_operand.hbm [shape: f32[32,64], index: 1, kind: input, shape index: {}]
  %s2 = inlined_call_operand.vmem [shape: f32[1,64], index: 2, kind: input, shape index: {}]
  %s3 = inlined_call_operand.hbm [shape: f32[16,64], index: 3, kind: output, shape index: {}]
  %s4 = sld [smem:[#allocation0]]
  $region30: #{intermediate_forward.1} parent=0
    _
  %s6 = ssub.s32 1, %s4
  %s7 = scalar_select 0, %s6, %s4
  $region1: #{intermediate_forward.1} parent=0
    #allocation2 [shape = 'u8[8192]{0}', space=vmem, size = 0x2000, scoped, tag = 'input window, operand 0, single buffered']
    #allocation3 [shape = 's32[1]{0}', space=sflag, size = 0x4, scoped, tag = 'scoped memory for intermediate_forward.1']
    #allocation4 [shape = 's32[1]{0}', space=sflag, size = 0x4, scoped, tag = 'scoped memory for intermediate_forward.1']
    #allocation5 [shape = 'u8[16384]{0}', space=vmem, size = 0x4000, scoped, tag = 'input window, operand 1, single buffered']
    #allocation6 [shape = 's32[1]{0}', space=sflag, size = 0x4, scoped, tag = 'scoped memory for intermediate_forward.1']
    #allocation7 [shape = 'u8[8192]{0}', space=vmem, size = 0x2000, scoped, tag = 'output window, operand 0, single buffered']
    %8 = vsyncpa [#allocation3], 0
    %9 = vsyncpa [#allocation6], 0
    %10 = vsyncpa [#allocation4], 0
    // Predicated region
    $region2: #{intermediate_forward.1} parent=1 // pred_check
      _
    $region3: #{intermediate_forward.1} parent=1 // pred_check_branch
      %12 = sbr.rel (0) target = $region5
    $region4: #{intermediate_forward.1} parent=1 // pred_region
      %s14 = ssub.s32 256, 256
      %15 = vsyncadd [#allocation3], %s14
      %s16 = sshll.u32 [#allocation2], 4
      %s17 = int_to_ptr.vmem [resolvable:$true] %s16
      %22 = dma.hbm_to_vmem [thread:$0]  %s0, 256, %s17, [#allocation3], 128, 128, 8
    $region5: #{intermediate_forward.1} parent=1 // pred_fallthru
      _
    // Predicated region
    $region6: #{intermediate_forward.1} parent=1 // pred_check
      _
    $region7: #{intermediate_forward.1} parent=1 // pred_check_branch
      %24 = sbr.rel (0) target = $region9
    $region8: #{intermediate_forward.1} parent=1 // pred_region
      %s26 = ssub.s32 512, 512
      %27 = vsyncadd [#allocation6], %s26
      %s28 = sshll.u32 [#allocation5], 4
      %s29 = int_to_ptr.vmem [resolvable:$true] %s28
      %34 = dma.hbm_to_vmem [thread:$0]  %s1, 512, %s29, [#allocation6], 128, 128, 8
    $region9: #{intermediate_forward.1} parent=1 // pred_fallthru
      _
    // Predicated region
    $region10: #{intermediate_forward.1} parent=1 // pred_check
      _
    $region11: #{intermediate_forward.1} parent=1 // pred_check_branch
      %36 = sbr.rel (0) target = $region13
    $region12: #{intermediate_forward.1} parent=1 // pred_region
      _
    $region13: #{intermediate_forward.1} parent=1 // pred_fallthru
      _
    // Predicated region
    $region14: #{intermediate_forward.1} parent=1 // pred_check
      _
    $region15: #{intermediate_forward.1} parent=1 // pred_check_branch
      %38 = sbr.rel (0) target = $region17
    $region16: #{intermediate_forward.1} parent=1 // pred_region
      %39 = dma.done [#allocation3], 256
    $region17: #{intermediate_forward.1} parent=1 // pred_fallthru
      _
    // Predicated region
    $region18: #{intermediate_forward.1} parent=1 // pred_check
      _
    $region19: #{intermediate_forward.1} parent=1 // pred_check_branch
      %41 = sbr.rel (0) target = $region21
    $region20: #{intermediate_forward.1} parent=1 // pred_region
      %42 = dma.done [#allocation6], 512
    $region21: #{intermediate_forward.1} parent=1 // pred_fallthru
      _
    %v43 = vld [vmem:[#allocation2] sm:$0xff]
    %v44 = vld [vmem:[#allocation2 + $0x8] sm:$0xff]
    %v45 = vld [vmem:[#allocation5] sm:$0xff]
    %v46 = vld [vmem:[#allocation5 + $0x8] sm:$0xff]
    %v47 = vld [vmem:[#allocation5 + $0x10] sm:$0xff]
    %v48 = vld [vmem:[#allocation5 + $0x18] sm:$0xff]
    %v49 = vld [vmem:[%s2] sm:$0x1]
    %v51 = vlaneseq
    %v52 = vshrl.u32 %v51, 7
    %v53 = vsub.s32 0, %v52
    %v54 = vrot.slane %v49, %v53
    %vm56 = vcmask 261120
    %v58 = vsel %vm56, %v43, 0
    %v61 = vsel %vm56, %v44, 0
    %63 = vmatprep.subr.mxu0 0.0
    %64 = vmatpush1.msra.mxu0 0.0
    %65 = vmatprep.subr.mxu0 0.0
    %66 = vmatpush1.msra.mxu0 0.0
    %67 = vmatprep.subr.mxu0 0.0
    %68 = vmatpush1.msra.mxu0 0.0
    %69 = vmatprep.subr.mxu0 0.0
    %70 = vmatpush1.msra.mxu0 0.0
    %71 = vmatprep.subr.mxu0 0.0
    %72 = vmatpush1.msra.mxu0 0.0
    %73 = vmatprep.subr.mxu0 0.0
    %74 = vmatpush1.msra.mxu0 0.0
    %75 = vmatprep.subr.mxu0 0.0
    %76 = vmatpush1.msra.mxu0 0.0
    %77 = vmatprep.subr.mxu0 0.0
    %78 = vmatpush1.msra.mxu0 0.0
    %79 = vmatprep.subr.mxu0 0.0
    %80 = vmatpush1.msra.mxu0 0.0
    %81 = vmatprep.subr.mxu0 0.0
    %82 = vmatpush1.msra.mxu0 0.0
    %83 = vmatprep.subr.mxu0 0.0
    %84 = vmatpush1.msra.mxu0 0.0
    %85 = vmatprep.subr.mxu0 0.0
    %86 = vmatpush1.msra.mxu0 0.0
    %87 = vmatprep.subr.mxu0 0.0
    %88 = vmatpush1.msra.mxu0 %v48
    %89 = vmatprep.subr.mxu0 0.0
    %90 = vmatpush1.msra.mxu0 %v47
    %91 = vmatprep.subr.mxu0 0.0
    %92 = vmatpush1.msra.mxu0 %v46
    %93 = vmatprep.subr.mxu0 0.0
    %94 = vmatpush1.msra.mxu0 %v45
    %95 = vmatprep.subr.mxu0 0.0
    %96 = vmatpush2.msra.mxu0 0.0
    %97 = vmatprep.subr.mxu0 0.0
    %98 = vmatpush2.msra.mxu0 0.0
    %99 = vmatprep.subr.mxu0 0.0
    %100 = vmatpush2.msra.mxu0 0.0
    %101 = vmatprep.subr.mxu0 0.0
    %102 = vmatpush2.msra.mxu0 0.0
    %103 = vmatprep.subr.mxu0 0.0
    %104 = vmatpush2.msra.mxu0 0.0
    %105 = vmatprep.subr.mxu0 0.0
    %106 = vmatpush2.msra.mxu0 0.0
    %107 = vmatprep.subr.mxu0 0.0
    %108 = vmatpush2.msra.mxu0 0.0
    %109 = vmatprep.subr.mxu0 0.0
    %110 = vmatpush2.msra.mxu0 0.0
    %111 = vmatprep.subr.mxu0 0.0
    %112 = vmatpush2.msra.mxu0 0.0
    %113 = vmatprep.subr.mxu0 0.0
    %114 = vmatpush2.msra.mxu0 0.0
    %115 = vmatprep.subr.mxu0 0.0
    %116 = vmatpush2.msra.mxu0 0.0
    %117 = vmatprep.subr.mxu0 0.0
    %118 = vmatpush2.msra.mxu0 0.0
    %119 = vmatprep.subr.mxu0 0.0
    %120 = vmatpush2.msra.mxu0 0.0
    %121 = vmatprep.subr.mxu0 0.0
    %122 = vmatpush2.msra.mxu0 0.0
    %123 = vmatprep.subr.mxu0 0.0
    %124 = vmatpush2.msra.mxu0 0.0
    %125 = vmatprep.subr.mxu0 0.0
    %126 = vmatpush2.msra.mxu0 0.0
    %127 = vmatprep.mubr.f32.mxu0 0.0
    %128 = vmatmul.mubr.f32.gmra.mxu0 %v58
    %v129 = vpop.f32.mrf.mxu0
    %v130 = vadd.f32 %v54, %v129
    %v131 = vpop.f32.mrf.mxu0
    %132 = vmatprep.mubr.f32.mxu0 0.0
    %133 = vmatmul.mubr.f32.gmra.mxu0 %v61
    %v134 = vpop.f32.mrf.mxu0
    %v135 = vadd.f32 %v54, %v134
    %v136 = vpop.f32.mrf.mxu0
    %137 = vdwg.mxu0
    %v138 = vmul.f32 %v130, 0.5
    %v139 = vmul.f32 %v135, 0.5
    %v140 = vmul.f32 %v130, 0.70710677
    %v141 = vmul.f32 %v135, 0.70710677
    %v142 = verf.f32.pop %v140
    %v143 = verf.f32.pop %v141
    %v144 = vadd.f32 %v142, 1.0
    %v145 = vadd.f32 %v143, 1.0
    %v146 = vmul.f32 %v138, %v144
    %v147 = vmul.f32 %v139, %v145
    %vm148 = vcmask 523264
    %149 = vst.msk [vmem:[#allocation7] sm:$0xff] %vm148, %v146
    %150 = vst.msk [vmem:[#allocation7 + $0x8] sm:$0xff] %vm148, %v147
    // Predicated region
    $region22: #{intermediate_forward.1} parent=1 // pred_check
      _
    $region23: #{intermediate_forward.1} parent=1 // pred_check_branch
      %152 = sbr.rel (0) target = $region25
    $region24: #{intermediate_forward.1} parent=1 // pred_region
      %s154 = ssub.s32 256, 256
      %155 = vsyncadd [#allocation4], %s154
      %s156 = sshll.u32 [#allocation7], 4
      %s157 = int_to_ptr.vmem [resolvable:$true] %s156
      %162 = dma.vmem_to_hbm [thread:$0]  %s157, 256, %s3, [#allocation4], 128, 128, 8
    $region25: #{intermediate_forward.1} parent=1 // pred_fallthru
      _
    // Predicated region
    $region26: #{intermediate_forward.1} parent=1 // pred_check
      _
    $region27: #{intermediate_forward.1} parent=1 // pred_check_branch
      %164 = sbr.rel (0) target = $region29
    $region28: #{intermediate_forward.1} parent=1 // pred_region
      %165 = dma.done [#allocation4], 256
    $region29: #{intermediate_forward.1} parent=1 // pred_fallthru
      _
    %166 = vsyncpa [#allocation3], 1
    %167 = vsyncpa [#allocation6], 1
    %168 = vsyncpa [#allocation4], 1

</llo_original>
